<compile_context>
chip_gen: v7x
topology: tpu7x:2x2x1
jax: 0.10.0
libtpu: 0.0.40
codegen_flags: <defaults>
</compile_context>

<pallas_src>
import jax
import jax.numpy as jnp
from jax.experimental import pallas as pl
from jax.experimental.pallas import tpu as pltpu


def _round_up(x, m):
    return -(-x // m) * m


# ----------------------------- Pallas kernel ------------------------------ #
def _make_char_rnn_kernel(T, B, Bp):
    """Build the fused CharRNN kernel for static (T, B, Bp)."""

    def kernel(
        tok_ref,      # SMEM (T, Bp) int32 token ids   (scalar prefetch)
        h0_ref,       # VMEM (Bp, Hp)  initial hidden state
        emb_ref,      # VMEM (Vp, Hp)  embedding table (lane padded)
        w_i_ref,      # VMEM (Hp, 3Hp) [W_ir | W_iz | W_in]  (in x out)
        w_h_ref,      # VMEM (Hp, 3Hp) [W_hr | W_hz | W_hn]
        b_rz_ref,     # VMEM (1, 2Hp)  [b_ir + b_hr | b_iz + b_hz] (pre-folded)
        b_in_ref,     # VMEM (1, Hp)
        b_hn_ref,     # VMEM (1, Hp)
        w_dec_ref,    # VMEM (Hp, Op)
        b_dec_ref,    # VMEM (1, Op)
        logits_ref,   # VMEM (T*Bp, Op) output logits (flattened time x batch)
        h_out_ref,    # VMEM (Bp, Hp)   final hidden state
        e_scr,        # VMEM (T*Bp, Hp)  scratch: gathered embeddings
        gi_scr,       # VMEM (T*Bp, 3Hp) scratch: batched input projections
        h_seq_scr,    # VMEM (T*Bp, Hp)  scratch: per-step hidden states
    ):
        hp = h0_ref.shape[1]

        # --- Embedding gather (exact row copies) for all T*B tokens. -------
        e_scr[...] = jnp.zeros_like(e_scr)        # padded batch rows stay 0
        for t in range(T):
            for b in range(B):
                tok = tok_ref[t, b]               # scalar from SMEM
                row = t * Bp + b
                e_scr[row:row + 1, :] = emb_ref[pl.ds(tok, 1), :]

        # --- Input projections for ALL steps: one big MXU matmul,
        #     off the serial critical path (M = T*Bp instead of Bp). ---------
        gi_scr[...] = jnp.dot(e_scr[...], w_i_ref[...],
                              preferred_element_type=jnp.float32)

        b_rz = b_rz_ref[...]
        b_in = b_in_ref[...]
        b_hn = b_hn_ref[...]

        # --- Serial GRU recurrence (small static T -> fully unrolled). ------
        h = h0_ref[...]                           # (Bp, Hp), carried in vregs
        for t in range(T):
            lo = t * Bp
            gi = gi_scr[lo:lo + Bp, :]                                 # (Bp, 3Hp)
            gh = jnp.dot(h, w_h_ref[...],
                         preferred_element_type=jnp.float32)           # (Bp, 3Hp)
            rz = jax.nn.sigmoid(gi[:, :2 * hp] + gh[:, :2 * hp] + b_rz)
            r = rz[:, :hp]
            z = rz[:, hp:]
            n = jnp.tanh(gi[:, 2 * hp:] + b_in + r * (gh[:, 2 * hp:] + b_hn))
            h = (1.0 - z) * n + z * h
            h_seq_scr[lo:lo + Bp, :] = h

        h_out_ref[...] = h                        # single final store

        # --- Batched decode: one (T*Bp, Hp) x (Hp, Op) matmul + bias. -------
        logits_ref[...] = (
            jnp.dot(h_seq_scr[...], w_dec_ref[...],
                    preferred_element_type=jnp.float32) + b_dec_ref[...])

    return kernel


def _char_rnn_pallas(tokens_p, h0_p, pp, T, B, Bp):
    Hp, Op, Vp = pp["Hp"], pp["Op"], pp["Vp"]
    H3 = 3 * Hp
    TB = T * Bp

    def full(shape):
        # full-array block, same block every step -> resident in VMEM
        return pl.BlockSpec(shape, lambda i, tok: (0,) * len(shape))

    kernel = _make_char_rnn_kernel(T, B, Bp)

    return pl.pallas_call(
        kernel,
        grid_spec=pltpu.PrefetchScalarGridSpec(
            num_scalar_prefetch=1,                # tokens -> SMEM
            grid=(1,),                            # whole sequence in one step
            in_specs=[
                full((Bp, Hp)),                   # h0
                full((Vp, Hp)),                   # embedding table
                full((Hp, H3)),                   # fused input weights
                full((Hp, H3)),                   # fused hidden weights
                full((1, 2 * Hp)),                # folded r/z bias
                full((1, Hp)),                    # b_in
                full((1, Hp)),                    # b_hn
                full((Hp, Op)),                   # decode weight
                full((1, Op)),                    # decode bias
            ],
            out_specs=(full((TB, Op)), full((Bp, Hp))),
            scratch_shapes=[
                pltpu.VMEM((TB, Hp), jnp.float32),   # e_scr
                pltpu.VMEM((TB, H3), jnp.float32),   # gi_scr
                pltpu.VMEM((TB, Hp), jnp.float32),   # h_seq_scr
            ],
        ),
        out_shape=(
            jax.ShapeDtypeStruct((TB, Op), jnp.float32),
            jax.ShapeDtypeStruct((Bp, Hp), jnp.float32),
        ),
        compiler_params=pltpu.CompilerParams(
            dimension_semantics=("arbitrary",)),
    )(tokens_p, h0_p, pp["embedding_p"], pp["w_i"], pp["w_h"], pp["b_rz"],
      pp["b_in"], pp["b_hn"], pp["w_dec"], pp["b_dec"])


# ------------------------------ wrappers ----------------------------------- #
def char_rnn_sequence(tokens, hidden, pp):
    """Run T GRU steps + embedding + decode in ONE pallas_call.

    tokens: (T, B) int32 token ids; hidden: (1, B, H) float32.
    returns (logits (T, B, O), new_hidden (1, B, H)).
    """
    T, B = tokens.shape
    H, O, Hp, Op = pp["H"], pp["O"], pp["Hp"], pp["Op"]
    Bp = _round_up(max(B, 8), 8)

    tokens_p = jnp.pad(tokens.astype(jnp.int32), ((0, 0), (0, Bp - B)))
    h0_p = jnp.pad(hidden[0], ((0, Bp - B), (0, Hp - H)))

    logits_flat, h_new_p = _char_rnn_pallas(tokens_p, h0_p, pp, T, B, Bp)
    logits = logits_flat.reshape(T, Bp, Op)[:, :B, :O]
    return logits, h_new_p[:B, :H][None]


def char_rnn_forward(x_tokens, hidden, pp):
    """One CharRNN.forward step (matches the PyTorch module: seq_len == 1)."""
    logits_seq, h_new = char_rnn_sequence(x_tokens[None, :], hidden, pp)
    return logits_seq[0], h_new


# --------------------- deterministic parameter init ----------------------- #
def init_params(key, vocab_size, hidden, output_size):
    ks = jax.random.split(key, 16)
    bound = 1.0 / jnp.sqrt(hidden)

    def uni(k, shape):
        return jax.random.uniform(k, shape, jnp.float32, -bound, bound)

    # nn.Embedding(vocab, hidden): N(0, 1)
    embedding = jax.random.normal(ks[0], (vocab_size, hidden), jnp.float32)

    # nn.GRU gate order [r, z, n]; stored per-gate, pre-transposed to (in, out).
    return dict(
        embedding=embedding,
        w_ir=uni(ks[1], (hidden, hidden)), w_iz=uni(ks[2], (hidden, hidden)),
        w_in=uni(ks[3], (hidden, hidden)),
        w_hr=uni(ks[4], (hidden, hidden)), w_hz=uni(ks[5], (hidden, hidden)),
        w_hn=uni(ks[6], (hidden, hidden)),
        b_ir=uni(ks[7], (1, hidden)), b_iz=uni(ks[8], (1, hidden)),
        b_in=uni(ks[9], (1, hidden)),
        b_hr=uni(ks[10], (1, hidden)), b_hz=uni(ks[11], (1, hidden)),
        b_hn=uni(ks[12], (1, hidden)),
        # nn.Linear(hidden, output): weight (O, H) -> transposed (H, O)
        w_dec=uni(ks[13], (hidden, output_size)),
        b_dec=uni(ks[14], (1, output_size)),
    )


def prepare_params(p):
    """One-time gate fusion + 128-lane zero-padding of the raw parameters."""
    H = p["w_ir"].shape[0]
    O = p["w_dec"].shape[1]
    V = p["embedding"].shape[0]
    Hp = _round_up(H, 128)
    Op = _round_up(O, 128)
    Vp = _round_up(V, 8)

    def pad2(a, rows, cols):
        return jnp.pad(a, ((0, rows - a.shape[0]), (0, cols - a.shape[1])))

    w_i = jnp.concatenate(
        [pad2(p["w_ir"], Hp, Hp), pad2(p["w_iz"], Hp, Hp), pad2(p["w_in"], Hp, Hp)], axis=1)
    w_h = jnp.concatenate(
        [pad2(p["w_hr"], Hp, Hp), pad2(p["w_hz"], Hp, Hp), pad2(p["w_hn"], Hp, Hp)], axis=1)
    b_rz = jnp.concatenate(
        [pad2(p["b_ir"] + p["b_hr"], 1, Hp), pad2(p["b_iz"] + p["b_hz"], 1, Hp)], axis=1)

    return dict(
        embedding_p=pad2(p["embedding"], Vp, Hp),
        w_i=w_i, w_h=w_h, b_rz=b_rz,
        b_in=pad2(p["b_in"], 1, Hp),
        b_hn=pad2(p["b_hn"], 1, Hp),
        w_dec=pad2(p["w_dec"], Hp, Op),
        b_dec=pad2(p["b_dec"], 1, Op),
        H=H, O=O, V=V, Hp=Hp, Op=Op, Vp=Vp,
    )


# --------------------------- pure-JAX reference ---------------------------- #
def reference_forward(x_tokens, hidden, p):
    e = jnp.take(p["embedding"], x_tokens, axis=0)
    h = hidden[0]
    r = jax.nn.sigmoid(e @ p["w_ir"] + p["b_ir"] + h @ p["w_hr"] + p["b_hr"])
    z = jax.nn.sigmoid(e @ p["w_iz"] + p["b_iz"] + h @ p["w_hz"] + p["b_hz"])
    n = jnp.tanh(e @ p["w_in"] + p["b_in"] + r * (h @ p["w_hn"] + p["b_hn"]))
    h_new = (1.0 - z) * n + z * h
    logits = h_new @ p["w_dec"] + p["b_dec"]
    return logits, h_new[None]


def reference_sequence(tokens, hidden, p):
    def step(h, x_t):
        logits, h_new = reference_forward(x_t, h, p)
        return h_new, logits
    h_final, logits_seq = jax.lax.scan(step, hidden, tokens)
    return logits_seq, h_final


if __name__ == "__main__":
    # Module defaults: input_size=100 (vocab), n_hidden=100, output_size=100.
    batch_size = 2
    vocab_size = 100
    hidden = 100
    output_size = 100
    seq_len = 8

    key = jax.random.PRNGKey(0)
    k_params, k_tok1, k_tok2 = jax.random.split(key, 3)
    raw_params = init_params(k_params, vocab_size, hidden, output_size)
    params = prepare_params(raw_params)

    # --- single-step forward (the module's forward(), seq_len == 1) ---
    x = jax.random.randint(k_tok1, (batch_size,), 0, vocab_size, dtype=jnp.int32)
    hidden_state = jnp.zeros((1, batch_size, hidden), jnp.float32)  # reset_hidden()

    logits, new_hidden = char_rnn_forward(x, hidden_state, params)
    logits = jax.block_until_ready(logits)
    new_hidden = jax.block_until_ready(new_hidden)

    ref_logits, ref_hidden = reference_forward(x, hidden_state, raw_params)
    assert logits.shape == (batch_size, output_size)
    assert new_hidden.shape == (1, batch_size, hidden)
    assert jnp.allclose(logits, ref_logits, atol=1e-4, rtol=1e-4)
    assert jnp.allclose(new_hidden, ref_hidden, atol=1e-4, rtol=1e-4)

    # --- multi-step: whole sequence, ONE kernel launch / ONE weight load ---
    toks = jax.random.randint(k_tok2, (seq_len, batch_size), 0, vocab_size,
                              dtype=jnp.int32)
    seq_logits, seq_hidden = char_rnn_sequence(toks, hidden_state, params)
    seq_logits = jax.block_until_ready(seq_logits)
    seq_hidden = jax.block_until_ready(seq_hidden)

    ref_seq_logits, ref_seq_hidden = reference_sequence(toks, hidden_state, raw_params)
    assert seq_logits.shape == (seq_len, batch_size, output_size)
    assert seq_hidden.shape == (1, batch_size, hidden)
    assert jnp.allclose(seq_logits, ref_seq_logits, atol=1e-4, rtol=1e-4)
    assert jnp.allclose(seq_hidden, ref_seq_hidden, atol=1e-4, rtol=1e-4)

    print("KERNEL_OK")
</pallas_src>

<mosaic_0001>
module attributes {stable_mosaic.version = 11 : i64} {
  func.func @kernel(%arg0: i32, %arg1: memref<1x8xi32, #tpu.memory_space<smem>>, %arg2: memref<8x128xf32, #tpu.memory_space<vmem>>, %arg3: memref<104x128xf32, #tpu.memory_space<vmem>>, %arg4: memref<128x384xf32, #tpu.memory_space<vmem>>, %arg5: memref<128x384xf32, #tpu.memory_space<vmem>>, %arg6: memref<1x256xf32, #tpu.memory_space<vmem>>, %arg7: memref<1x128xf32, #tpu.memory_space<vmem>>, %arg8: memref<1x128xf32, #tpu.memory_space<vmem>>, %arg9: memref<128x128xf32, #tpu.memory_space<vmem>>, %arg10: memref<1x128xf32, #tpu.memory_space<vmem>>, %arg11: memref<8x128xf32, #tpu.memory_space<vmem>>, %arg12: memref<8x128xf32, #tpu.memory_space<vmem>>, %arg13: memref<8x128xf32, #tpu.memory_space<vmem>>, %arg14: memref<8x384xf32, #tpu.memory_space<vmem>>, %arg15: memref<8x128xf32, #tpu.memory_space<vmem>>) attributes {dimension_semantics = [#tpu.dimension_semantics<arbitrary>], iteration_bounds = array<i64: 1>, scalar_prefetch = 1 : i64, scratch_operands = 3 : i64, tpu.core_type = #tpu.core_type<tc>, window_params = [{pipeline_mode = #tpu.pipeline_mode<synchronous>, transform_indices = @transform_0, window_bounds = array<i64: 8, 128>}, {pipeline_mode = #tpu.pipeline_mode<synchronous>, transform_indices = @transform_1, window_bounds = array<i64: 104, 128>}, {pipeline_mode = #tpu.pipeline_mode<synchronous>, transform_indices = @transform_2, window_bounds = array<i64: 128, 384>}, {pipeline_mode = #tpu.pipeline_mode<synchronous>, transform_indices = @transform_3, window_bounds = array<i64: 128, 384>}, {pipeline_mode = #tpu.pipeline_mode<synchronous>, transform_indices = @transform_4, window_bounds = array<i64: 1, 256>}, {pipeline_mode = #tpu.pipeline_mode<synchronous>, transform_indices = @transform_5, window_bounds = array<i64: 1, 128>}, {pipeline_mode = #tpu.pipeline_mode<synchronous>, transform_indices = @transform_6, window_bounds = array<i64: 1, 128>}, {pipeline_mode = #tpu.pipeline_mode<synchronous>, transform_indices = @transform_7, window_bounds = array<i64: 128, 128>}, {pipeline_mode = #tpu.pipeline_mode<synchronous>, transform_indices = @transform_8, window_bounds = array<i64: 1, 128>}, {pipeline_mode = #tpu.pipeline_mode<synchronous>, transform_indices = @transform_9, window_bounds = array<i64: 8, 128>}, {pipeline_mode = #tpu.pipeline_mode<synchronous>, transform_indices = @transform_10, window_bounds = array<i64: 8, 128>}]} {
    %cst = arith.constant 0.000000e+00 : f32
    %0 = vector.broadcast %cst : f32 to vector<8x128xf32>
    %c0 = arith.constant 0 : index
    %c0_0 = arith.constant 0 : index
    %1 = vector.load %arg13[%c0, %c0_0] : memref<8x128xf32, #tpu.memory_space<vmem>>, vector<8x128xf32>
    tpu.vector_store %arg13[%c0, %c0_0], %0 {strides = array<i32>} : memref<8x128xf32, #tpu.memory_space<vmem>>, vector<8x128xf32>,
    %c0_1 = arith.constant 0 : index
    %c0_2 = arith.constant 0 : index
    %2 = memref.load %arg1[%c0_1, %c0_2] : memref<1x8xi32, #tpu.memory_space<smem>>
    %3 = arith.index_cast %2 : i32 to index
    %c0_3 = arith.constant 0 : index
    %4 = vector.load %arg3[%3, %c0_3] : memref<104x128xf32, #tpu.memory_space<vmem>>, vector<1x128xf32>
    %c0_4 = arith.constant 0 : index
    %c0_5 = arith.constant 0 : index
    %5 = vector.load %arg13[%c0_4, %c0_5] : memref<8x128xf32, #tpu.memory_space<vmem>>, vector<1x128xf32>
    tpu.vector_store %arg13[%c0_4, %c0_5], %4 {strides = array<i32>} : memref<8x128xf32, #tpu.memory_space<vmem>>, vector<1x128xf32>,
    %c0_6 = arith.constant 0 : index
    %c1 = arith.constant 1 : index
    %6 = memref.load %arg1[%c0_6, %c1] : memref<1x8xi32, #tpu.memory_space<smem>>
    %7 = arith.index_cast %6 : i32 to index
    %c0_7 = arith.constant 0 : index
    %8 = vector.load %arg3[%7, %c0_7] : memref<104x128xf32, #tpu.memory_space<vmem>>, vector<1x128xf32>
    %c1_8 = arith.constant 1 : index
    %c0_9 = arith.constant 0 : index
    %9 = vector.load %arg13[%c1_8, %c0_9] : memref<8x128xf32, #tpu.memory_space<vmem>>, vector<1x128xf32>
    tpu.vector_store %arg13[%c1_8, %c0_9], %8 {strides = array<i32>} : memref<8x128xf32, #tpu.memory_space<vmem>>, vector<1x128xf32>,
    %c0_10 = arith.constant 0 : index
    %c0_11 = arith.constant 0 : index
    %10 = vector.load %arg13[%c0_10, %c0_11] : memref<8x128xf32, #tpu.memory_space<vmem>>, vector<8x128xf32>
    %c0_12 = arith.constant 0 : index
    %c0_13 = arith.constant 0 : index
    %11 = vector.load %arg4[%c0_12, %c0_13] : memref<128x384xf32, #tpu.memory_space<vmem>>, vector<128x384xf32>
    %cst_14 = arith.constant dense<0.000000e+00> : vector<8x384xf32>
    %12 = tpu.matmul %10, %11, %cst_14 {dimension_numbers = #tpu.dot_dimension_numbers<[1], [0], [0], [1], [0, 0, 1, 1], [], []>} : vector<8x128xf32>, vector<128x384xf32>, vector<8x384xf32> -> vector<8x384xf32>
    %c0_15 = arith.constant 0 : index
    %c0_16 = arith.constant 0 : index
    %13 = vector.load %arg14[%c0_15, %c0_16] : memref<8x384xf32, #tpu.memory_space<vmem>>, vector<8x384xf32>
    tpu.vector_store %arg14[%c0_15, %c0_16], %12 {strides = array<i32>} : memref<8x384xf32, #tpu.memory_space<vmem>>, vector<8x384xf32>,
    %c0_17 = arith.constant 0 : index
    %c0_18 = arith.constant 0 : index
    %14 = vector.load %arg6[%c0_17, %c0_18] : memref<1x256xf32, #tpu.memory_space<vmem>>, vector<1x256xf32>
    %c0_19 = arith.constant 0 : index
    %c0_20 = arith.constant 0 : index
    %15 = vector.load %arg7[%c0_19, %c0_20] : memref<1x128xf32, #tpu.memory_space<vmem>>, vector<1x128xf32>
    %c0_21 = arith.constant 0 : index
    %c0_22 = arith.constant 0 : index
    %16 = vector.load %arg8[%c0_21, %c0_22] : memref<1x128xf32, #tpu.memory_space<vmem>>, vector<1x128xf32>
    %c0_23 = arith.constant 0 : index
    %c0_24 = arith.constant 0 : index
    %17 = vector.load %arg2[%c0_23, %c0_24] : memref<8x128xf32, #tpu.memory_space<vmem>>, vector<8x128xf32>
    %c0_25 = arith.constant 0 : index
    %c0_26 = arith.constant 0 : index
    %18 = vector.load %arg14[%c0_25, %c0_26] : memref<8x384xf32, #tpu.memory_space<vmem>>, vector<8x384xf32>
    %c0_27 = arith.constant 0 : index
    %c0_28 = arith.constant 0 : index
    %19 = vector.load %arg5[%c0_27, %c0_28] : memref<128x384xf32, #tpu.memory_space<vmem>>, vector<128x384xf32>
    %cst_29 = arith.constant dense<0.000000e+00> : vector<8x384xf32>
    %20 = tpu.matmul %17, %19, %cst_29 {dimension_numbers = #tpu.dot_dimension_numbers<[1], [0], [0], [1], [0, 0, 1, 1], [], []>} : vector<8x128xf32>, vector<128x384xf32>, vector<8x384xf32> -> vector<8x384xf32>
    %21 = vector.extract_strided_slice %18 {offsets = [0, 0], sizes = [8, 256], strides = [1, 1]} : vector<8x384xf32> to vector<8x256xf32>
    %22 = vector.extract_strided_slice %20 {offsets = [0, 0], sizes = [8, 256], strides = [1, 1]} : vector<8x384xf32> to vector<8x256xf32>
    %23 = arith.addf %21, %22 : vector<8x256xf32>
    %24 = vector.broadcast %14 : vector<1x256xf32> to vector<8x256xf32>
    %25 = arith.addf %23, %24 : vector<8x256xf32>
    %26 = arith.negf %25 : vector<8x256xf32>
    %27 = math.exp %26 : vector<8x256xf32>
    %cst_30 = arith.constant 1.000000e+00 : f32
    %28 = vector.broadcast %cst_30 : f32 to vector<8x256xf32>
    %29 = arith.addf %28, %27 : vector<8x256xf32>
    %30 = arith.divf %28, %29 : vector<8x256xf32>
    %31 = vector.extract_strided_slice %30 {offsets = [0, 0], sizes = [8, 128], strides = [1, 1]} : vector<8x256xf32> to vector<8x128xf32>
    %32 = vector.extract_strided_slice %30 {offsets = [0, 128], sizes = [8, 128], strides = [1, 1]} : vector<8x256xf32> to vector<8x128xf32>
    %33 = vector.extract_strided_slice %18 {offsets = [0, 256], sizes = [8, 128], strides = [1, 1]} : vector<8x384xf32> to vector<8x128xf32>
    %34 = vector.broadcast %15 : vector<1x128xf32> to vector<8x128xf32>
    %35 = arith.addf %33, %34 : vector<8x128xf32>
    %36 = vector.extract_strided_slice %20 {offsets = [0, 256], sizes = [8, 128], strides = [1, 1]} : vector<8x384xf32> to vector<8x128xf32>
    %37 = vector.broadcast %16 : vector<1x128xf32> to vector<8x128xf32>
    %38 = arith.addf %36, %37 : vector<8x128xf32>
    %39 = arith.mulf %31, %38 : vector<8x128xf32>
    %40 = arith.addf %35, %39 : vector<8x128xf32>
    %41 = math.tanh %40 : vector<8x128xf32>
    %cst_31 = arith.constant 1.000000e+00 : f32
    %42 = vector.broadcast %cst_31 : f32 to vector<8x128xf32>
    %43 = arith.subf %42, %32 : vector<8x128xf32>
    %44 = arith.mulf %43, %41 : vector<8x128xf32>
    %45 = arith.mulf %32, %17 : vector<8x128xf32>
    %46 = arith.addf %44, %45 : vector<8x128xf32>
    %c0_32 = arith.constant 0 : index
    %c0_33 = arith.constant 0 : index
    %47 = vector.load %arg15[%c0_32, %c0_33] : memref<8x128xf32, #tpu.memory_space<vmem>>, vector<8x128xf32>
    tpu.vector_store %arg15[%c0_32, %c0_33], %46 {strides = array<i32>} : memref<8x128xf32, #tpu.memory_space<vmem>>, vector<8x128xf32>,
    %c0_34 = arith.constant 0 : index
    %c0_35 = arith.constant 0 : index
    %48 = vector.load %arg12[%c0_34, %c0_35] : memref<8x128xf32, #tpu.memory_space<vmem>>, vector<8x128xf32>
    tpu.vector_store %arg12[%c0_34, %c0_35], %46 {strides = array<i32>} : memref<8x128xf32, #tpu.memory_space<vmem>>, vector<8x128xf32>,
    %c0_36 = arith.constant 0 : index
    %c0_37 = arith.constant 0 : index
    %49 = vector.load %arg15[%c0_36, %c0_37] : memref<8x128xf32, #tpu.memory_space<vmem>>, vector<8x128xf32>
    %c0_38 = arith.constant 0 : index
    %c0_39 = arith.constant 0 : index
    %50 = vector.load %arg9[%c0_38, %c0_39] : memref<128x128xf32, #tpu.memory_space<vmem>>, vector<128x128xf32>
    %cst_40 = arith.constant dense<0.000000e+00> : vector<8x128xf32>
    %51 = tpu.matmul %49, %50, %cst_40 {dimension_numbers = #tpu.dot_dimension_numbers<[1], [0], [0], [1], [0, 0, 1, 1], [], []>} : vector<8x128xf32>, vector<128x128xf32>, vector<8x128xf32> -> vector<8x128xf32>
    %c0_41 = arith.constant 0 : index
    %c0_42 = arith.constant 0 : index
    %52 = vector.load %arg10[%c0_41, %c0_42] : memref<1x128xf32, #tpu.memory_space<vmem>>, vector<1x128xf32>
    %53 = vector.broadcast %52 : vector<1x128xf32> to vector<8x128xf32>
    %54 = arith.addf %51, %53 : vector<8x128xf32>
    %c0_43 = arith.constant 0 : index
    %c0_44 = arith.constant 0 : index
    %55 = vector.load %arg11[%c0_43, %c0_44] : memref<8x128xf32, #tpu.memory_space<vmem>>, vector<8x128xf32>
    tpu.vector_store %arg11[%c0_43, %c0_44], %54 {strides = array<i32>} : memref<8x128xf32, #tpu.memory_space<vmem>>, vector<8x128xf32>,
    return
  }
  func.func @transform_0(%arg0: i32, %arg1: memref<1x8xi32, #tpu.memory_space<smem>>) -> (i32, i32) {
    %c0_i32 = arith.constant 0 : i32
    %c0_i32_0 = arith.constant 0 : i32
    %c0_i32_1 = arith.constant 0 : i32
    return %c0_i32, %c0_i32_0 : i32, i32
  }
  func.func @transform_1(%arg0: i32, %arg1: memref<1x8xi32, #tpu.memory_space<smem>>) -> (i32, i32) {
    %c0_i32 = arith.constant 0 : i32
    %c0_i32_0 = arith.constant 0 : i32
    %c0_i32_1 = arith.constant 0 : i32
    return %c0_i32, %c0_i32_0 : i32, i32
  }
  func.func @transform_2(%arg0: i32, %arg1: memref<1x8xi32, #tpu.memory_space<smem>>) -> (i32, i32) {
    %c0_i32 = arith.constant 0 : i32
    %c0_i32_0 = arith.constant 0 : i32
    %c0_i32_1 = arith.constant 0 : i32
    return %c0_i32, %c0_i32_0 : i32, i32
  }
  func.func @transform_3(%arg0: i32, %arg1: memref<1x8xi32, #tpu.memory_space<smem>>) -> (i32, i32) {
    %c0_i32 = arith.constant 0 : i32
    %c0_i32_0 = arith.constant 0 : i32
    %c0_i32_1 = arith.constant 0 : i32
    return %c0_i32, %c0_i32_0 : i32, i32
  }
  func.func @transform_4(%arg0: i32, %arg1: memref<1x8xi32, #tpu.memory_space<smem>>) -> (i32, i32) {
    %c0_i32 = arith.constant 0 : i32
    %c0_i32_0 = arith.constant 0 : i32
    %c0_i32_1 = arith.constant 0 : i32
    return %c0_i32, %c0_i32_0 : i32, i32
  }
  func.func @transform_5(%arg0: i32, %arg1: memref<1x8xi32, #tpu.memory_space<smem>>) -> (i32, i32) {
    %c0_i32 = arith.constant 0 : i32
    %c0_i32_0 = arith.constant 0 : i32
    %c0_i32_1 = arith.constant 0 : i32
    return %c0_i32, %c0_i32_0 : i32, i32
  }
  func.func @transform_6(%arg0: i32, %arg1: memref<1x8xi32, #tpu.memory_space<smem>>) -> (i32, i32) {
    %c0_i32 = arith.constant 0 : i32
    %c0_i32_0 = arith.constant 0 : i32
    %c0_i32_1 = arith.constant 0 : i32
    return %c0_i32, %c0_i32_0 : i32, i32
  }
  func.func @transform_7(%arg0: i32, %arg1: memref<1x8xi32, #tpu.memory_space<smem>>) -> (i32, i32) {
    %c0_i32 = arith.constant 0 : i32
    %c0_i32_0 = arith.constant 0 : i32
    %c0_i32_1 = arith.constant 0 : i32
    return %c0_i32, %c0_i32_0 : i32, i32
  }
  func.func @transform_8(%arg0: i32, %arg1: memref<1x8xi32, #tpu.memory_space<smem>>) -> (i32, i32) {
    %c0_i32 = arith.constant 0 : i32
    %c0_i32_0 = arith.constant 0 : i32
    %c0_i32_1 = arith.constant 0 : i32
    return %c0_i32, %c0_i32_0 : i32, i32
  }
  func.func @transform_9(%arg0: i32, %arg1: memref<1x8xi32, #tpu.memory_space<smem>>) -> (i32, i32) {
    %c0_i32 = arith.constant 0 : i32
    %c0_i32_0 = arith.constant 0 : i32
    %c0_i32_1 = arith.constant 0 : i32
    return %c0_i32, %c0_i32_0 : i32, i32
  }
  func.func @transform_10(%arg0: i32, %arg1: memref<1x8xi32, #tpu.memory_space<smem>>) -> (i32, i32) {
    %c0_i32 = arith.constant 0 : i32
    %c0_i32_0 = arith.constant 0 : i32
    %c0_i32_1 = arith.constant 0 : i32
    return %c0_i32, %c0_i32_0 : i32, i32
  }
}

</mosaic_0001>

<llo_original>
// kernel: tpu_custom_call.1
$region0: #{tpu_custom_call.1}
  #allocation0 [shape = 'u32[]', space=smem, size = 0x4, offset = 0x4, fixed_abs, tag = 'smem constant byte address 0x4 - core index']
  #allocation1 [shape = 'u32[144,128]{1,0:T(1,128)}', space=vmem, size = 0x12000, scoped, tag = 'internal scratch']
  #allocation2 [shape = 'f32[8,128]{1,0:T(8,128)}', space=vmem, size = 0x1000, scoped, tag = 'scratch operand']
  #allocation3 [shape = 'f32[8,384]{1,0:T(8,128)}', space=vmem, size = 0x3000, scoped, tag = 'scratch operand']
  #allocation4 [shape = 'f32[8,128]{1,0:T(8,128)}', space=vmem, size = 0x1000, scoped, tag = 'scratch operand']
  #allocation5 [shape = 's32[1]{0}', space=sflag, size = 0x4, scoped, tag = 'scoped memory for tpu_custom_call.1']
  #allocation6 [shape = 'u8[512]{0}', space=smem, size = 0x200, scoped, tag = 'prefetched SMEM operand 0']
  %s0 = inlined_call_operand.hbm [shape: s32[1,8], index: 0, kind: input, shape index: {}]
  %s1 = inlined_call_operand.hbm [shape: f32[8,128], index: 1, kind: input, shape index: {}]
  %s2 = inlined_call_operand.hbm [shape: f32[104,128], index: 2, kind: input, shape index: {}]
  %s3 = inlined_call_operand.hbm [shape: f32[128,384], index: 3, kind: input, shape index: {}]
  %s4 = inlined_call_operand.hbm [shape: f32[128,384], index: 4, kind: input, shape index: {}]
  %s5 = inlined_call_operand.vmem [shape: f32[1,256], index: 5, kind: input, shape index: {}]
  %s6 = inlined_call_operand.vmem [shape: f32[1,128], index: 6, kind: input, shape index: {}]
  %s7 = inlined_call_operand.vmem [shape: f32[1,128], index: 7, kind: input, shape index: {}]
  %s8 = inlined_call_operand.hbm [shape: f32[128,128], index: 8, kind: input, shape index: {}]
  %s9 = inlined_call_operand.vmem [shape: f32[1,128], index: 9, kind: input, shape index: {}]
  %s10 = inlined_call_operand.hbm [shape: f32[8,128], index: 10, kind: output, shape index: {0}]
  %s11 = inlined_call_operand.hbm [shape: f32[8,128], index: 11, kind: output, shape index: {1}]
  %12 = xla_tuple %s10, %s11
  %s13 = sld [smem:[#allocation0]]
  $region74: #{tpu_custom_call.1} parent=0
    _
  %s15 = ssub.s32 1, %s13
  %s16 = scalar_select 0, %s15, %s13
  %18 = dma.hbm_to_smem %s0, 16, [#allocation6], [#allocation5]
  %19 = dma.done [#allocation5], 16
  %20 = sfence
  $region1: #{tpu_custom_call.1} parent=0
    #allocation7 [shape = 'u8[4096]{0}', space=vmem, size = 0x1000, scoped, tag = 'input window, operand 1, single buffered']
    #allocation8 [shape = 's32[1]{0}', space=sflag, size = 0x4, scoped, tag = 'scoped memory for tpu_custom_call.1']
    #allocation9 [shape = 's32[1]{0}', space=sflag, size = 0x4, scoped, tag = 'scoped memory for tpu_custom_call.1']
    #allocation10 [shape = 'u8[53248]{0}', space=vmem, size = 0xd000, scoped, tag = 'input window, operand 2, single buffered']
    #allocation11 [shape = 's32[1]{0}', space=sflag, size = 0x4, scoped, tag = 'scoped memory for tpu_custom_call.1']
    #allocation12 [shape = 'u8[196608]{0}', space=vmem, size = 0x30000, scoped, tag = 'input window, operand 3, single buffered']
    #allocation13 [shape = 'u8[196608]{0}', space=vmem, size = 0x30000, scoped, tag = 'input window, operand 4, single buffered']
    #allocation14 [shape = 's32[1]{0}', space=sflag, size = 0x4, scoped, tag = 'scoped memory for tpu_custom_call.1']
    #allocation15 [shape = 'u8[65536]{0}', space=vmem, size = 0x10000, scoped, tag = 'input window, operand 8, single buffered']
    #allocation16 [shape = 'u8[4096]{0}', space=vmem, size = 0x1000, scoped, tag = 'output window, operand 0, single buffered']
    #allocation17 [shape = 'u8[4096]{0}', space=vmem, size = 0x1000, scoped, tag = 'output window, operand 1, single buffered']
    #allocation18 [shape = 's32[1]{0}', space=sflag, size = 0x4, scoped, tag = 'scoped memory for tpu_custom_call.1']
    %21 = vsyncpa [#allocation8], 0
    %22 = vsyncpa [#allocation11], 0
    %23 = vsyncpa [#allocation14], 0
    %24 = vsyncpa [#allocation9], 0
    %25 = vsyncpa [#allocation18], 0
    // Predicated region
    $region2: #{tpu_custom_call.1} parent=1 // pred_check
      _
    $region3: #{tpu_custom_call.1} parent=1 // pred_check_branch
      %27 = sbr.rel (0) target = $region5
    $region4: #{tpu_custom_call.1} parent=1 // pred_region
      %s29 = ssub.s32 128, 128
      %30 = vsyncadd [#allocation8], %s29
      %s32 = sshll.u32 [#allocation7], 4
      %s33 = int_to_ptr.vmem [resolvable:$true] %s32
      %35 = dma.hbm_to_vmem [thread:$0]  %s1, 128, %s33, [#allocation8]
    $region5: #{tpu_custom_call.1} parent=1 // pred_fallthru
      _
    // Predicated region
    $region6: #{tpu_custom_call.1} parent=1 // pred_check
      _
    $region7: #{tpu_custom_call.1} parent=1 // pred_check_branch
      %37 = sbr.rel (0) target = $region9
    $region8: #{tpu_custom_call.1} parent=1 // pred_region
      %s39 = ssub.s32 1664, 1664
      %40 = vsyncadd [#allocation11], %s39
      %s41 = sshll.u32 [#allocation10], 4
      %s42 = int_to_ptr.vmem [resolvable:$true] %s41
      %47 = dma.hbm_to_vmem [thread:$0]  %s2, 1664, %s42, [#allocation11], 128, 128, 8
    $region9: #{tpu_custom_call.1} parent=1 // pred_fallthru
      _
    // Predicated region
    $region10: #{tpu_custom_call.1} parent=1 // pred_check
      _
    $region11: #{tpu_custom_call.1} parent=1 // pred_check_branch
      %49 = sbr.rel (0) target = $region13
    $region12: #{tpu_custom_call.1} parent=1 // pred_region
      %s51 = ssub.s32 6144, 6144
      %52 = vsyncadd [#allocation11], %s51
      %s53 = sshll.u32 [#allocation12], 4
      %s54 = int_to_ptr.vmem [resolvable:$true] %s53
      %59 = dma.hbm_to_vmem [thread:$0]  %s3, 6144, %s54, [#allocation11], 384, 384, 24
    $region13: #{tpu_custom_call.1} parent=1 // pred_fallthru
      _
    // Predicated region
    $region14: #{tpu_custom_call.1} parent=1 // pred_check
      _
    $region15: #{tpu_custom_call.1} parent=1 // pred_check_branch
      %61 = sbr.rel (0) target = $region17
    $region16: #{tpu_custom_call.1} parent=1 // pred_region
      %s63 = ssub.s32 6144, 6144
      %64 = vsyncadd [#allocation14], %s63
      %s65 = sshll.u32 [#allocation13], 4
      %s66 = int_to_ptr.vmem [resolvable:$true] %s65
      %71 = dma.hbm_to_vmem [thread:$0]  %s4, 6144, %s66, [#allocation14], 384, 384, 24
    $region17: #{tpu_custom_call.1} parent=1 // pred_fallthru
      _
    // Predicated region
    $region18: #{tpu_custom_call.1} parent=1 // pred_check
      _
    $region19: #{tpu_custom_call.1} parent=1 // pred_check_branch
      %73 = sbr.rel (0) target = $region21
    $region20: #{tpu_custom_call.1} parent=1 // pred_region
      _
    $region21: #{tpu_custom_call.1} parent=1 // pred_fallthru
      _
    // Predicated region
    $region22: #{tpu_custom_call.1} parent=1 // pred_check
      _
    $region23: #{tpu_custom_call.1} parent=1 // pred_check_branch
      %75 = sbr.rel (0) target = $region25
    $region24: #{tpu_custom_call.1} parent=1 // pred_region
      _
    $region25: #{tpu_custom_call.1} parent=1 // pred_fallthru
      _
    // Predicated region
    $region26: #{tpu_custom_call.1} parent=1 // pred_check
      _
    $region27: #{tpu_custom_call.1} parent=1 // pred_check_branch
      %77 = sbr.rel (0) target = $region29
    $region28: #{tpu_custom_call.1} parent=1 // pred_region
      _
    $region29: #{tpu_custom_call.1} parent=1 // pred_fallthru
      _
    // Predicated region
    $region30: #{tpu_custom_call.1} parent=1 // pred_check
      _
    $region31: #{tpu_custom_call.1} parent=1 // pred_check_branch
      %79 = sbr.rel (0) target = $region33
    $region32: #{tpu_custom_call.1} parent=1 // pred_region
      %s81 = ssub.s32 2048, 2048
      %82 = vsyncadd [#allocation14], %s81
      %s83 = sshll.u32 [#allocation15], 4
      %s84 = int_to_ptr.vmem [resolvable:$true] %s83
      %89 = dma.hbm_to_vmem [thread:$0]  %s8, 2048, %s84, [#allocation14], 128, 128, 8
    $region33: #{tpu_custom_call.1} parent=1 // pred_fallthru
      _
    // Predicated region
    $region34: #{tpu_custom_call.1} parent=1 // pred_check
      _
    $region35: #{tpu_custom_call.1} parent=1 // pred_check_branch
      %91 = sbr.rel (0) target = $region37
    $region36: #{tpu_custom_call.1} parent=1 // pred_region
      _
    $region37: #{tpu_custom_call.1} parent=1 // pred_fallthru
      _
    // Predicated region
    $region38: #{tpu_custom_call.1} parent=1 // pred_check
      _
    $region39: #{tpu_custom_call.1} parent=1 // pred_check_branch
      %93 = sbr.rel (0) target = $region41
    $region40: #{tpu_custom_call.1} parent=1 // pred_region
      %94 = dma.done [#allocation8], 128
    $region41: #{tpu_custom_call.1} parent=1 // pred_fallthru
      _
    // Predicated region
    $region42: #{tpu_custom_call.1} parent=1 // pred_check
      _
    $region43: #{tpu_custom_call.1} parent=1 // pred_check_branch
      %96 = sbr.rel (0) target = $region45
    $region44: #{tpu_custom_call.1} parent=1 // pred_region
      %97 = dma.done [#allocation11], 1664
    $region45: #{tpu_custom_call.1} parent=1 // pred_fallthru
      _
    // Predicated region
    $region46: #{tpu_custom_call.1} parent=1 // pred_check
      _
    $region47: #{tpu_custom_call.1} parent=1 // pred_check_branch
      %99 = sbr.rel (0) target = $region49
    $region48: #{tpu_custom_call.1} parent=1 // pred_region
      %100 = dma.done [#allocation11], 6144
    $region49: #{tpu_custom_call.1} parent=1 // pred_fallthru
      _
    // Predicated region
    $region50: #{tpu_custom_call.1} parent=1 // pred_check
      _
    $region51: #{tpu_custom_call.1} parent=1 // pred_check_branch
      %102 = sbr.rel (0) target = $region53
    $region52: #{tpu_custom_call.1} parent=1 // pred_region
      %103 = dma.done [#allocation14], 6144
    $region53: #{tpu_custom_call.1} parent=1 // pred_fallthru
      _
    // Predicated region
    $region54: #{tpu_custom_call.1} parent=1 // pred_check
      _
    $region55: #{tpu_custom_call.1} parent=1 // pred_check_branch
      %105 = sbr.rel (0) target = $region57
    $region56: #{tpu_custom_call.1} parent=1 // pred_region
      %106 = dma.done [#allocation14], 2048
    $region57: #{tpu_custom_call.1} parent=1 // pred_fallthru
      _
    %107 = vst [vmem:[#allocation2] sm:$0xff] 0.0
    %s108 = sld [smem:[#allocation6]]
    %s109 = scalar_lea.vmem [#allocation10], %s108
    %v110 = vld [vmem:[%s109] sm:$0x1]
    %111 = vst [vmem:[#allocation2] sm:$0x1] %v110
    %s112 = sld [smem:[#allocation6 + $0x1]]
    %s113 = scalar_lea.vmem [#allocation10], %s112
    %v114 = vld [vmem:[%s113] sm:$0x1]
    %115 = vst [vmem:[#allocation2 + $0x1] sm:$0x1] %v114
    %v116 = vld [vmem:[#allocation2] sm:$0xff]
    %v117 = vld [vmem:[#allocation12] sm:$0xff]
    %v118 = vld [vmem:[#allocation12 + $0x8] sm:$0xff]
    %v119 = vld [vmem:[#allocation12 + $0x10] sm:$0xff]
    %v120 = vld [vmem:[#allocation12 + $0x18] sm:$0xff]
    %v121 = vld [vmem:[#allocation12 + $0x20] sm:$0xff]
    %v122 = vld [vmem:[#allocation12 + $0x28] sm:$0xff]
    %v123 = vld [vmem:[#allocation12 + $0x30] sm:$0xff]
    %v124 = vld [vmem:[#allocation12 + $0x38] sm:$0xff]
    %v125 = vld [vmem:[#allocation12 + $0x40] sm:$0xff]
    %v126 = vld [vmem:[#allocation12 + $0x48] sm:$0xff]
    %v127 = vld [vmem:[#allocation12 + $0x50] sm:$0xff]
    %v128 = vld [vmem:[#allocation12 + $0x58] sm:$0xff]
    %v129 = vld [vmem:[#allocation12 + $0x60] sm:$0xff]
    %v130 = vld [vmem:[#allocation12 + $0x68] sm:$0xff]
    %v131 = vld [vmem:[#allocation12 + $0x70] sm:$0xff]
    %v132 = vld [vmem:[#allocation12 + $0x78] sm:$0xff]
    %v133 = vld [vmem:[#allocation12 + $0x80] sm:$0xff]
    %v134 = vld [vmem:[#allocation12 + $0x88] sm:$0xff]
    %v135 = vld [vmem:[#allocation12 + $0x90] sm:$0xff]
    %v136 = vld [vmem:[#allocation12 + $0x98] sm:$0xff]
    %v137 = vld [vmem:[#allocation12 + $0xa0] sm:$0xff]
    %v138 = vld [vmem:[#allocation12 + $0xa8] sm:$0xff]
    %v139 = vld [vmem:[#allocation12 + $0xb0] sm:$0xff]
    %v140 = vld [vmem:[#allocation12 + $0xb8] sm:$0xff]
    %v141 = vld [vmem:[#allocation12 + $0xc0] sm:$0xff]
    %v142 = vld [vmem:[#allocation12 + $0xc8] sm:$0xff]
    %v143 = vld [vmem:[#allocation12 + $0xd0] sm:$0xff]
    %v144 = vld [vmem:[#allocation12 + $0xd8] sm:$0xff]
    %v145 = vld [vmem:[#allocation12 + $0xe0] sm:$0xff]
    %v146 = vld [vmem:[#allocation12 + $0xe8] sm:$0xff]
    %v147 = vld [vmem:[#allocation12 + $0xf0] sm:$0xff]
    %v148 = vld [vmem:[#allocation12 + $0xf8] sm:$0xff]
    %v149 = vld [vmem:[#allocation12 + $0x100] sm:$0xff]
    %v150 = vld [vmem:[#allocation12 + $0x108] sm:$0xff]
    %v151 = vld [vmem:[#allocation12 + $0x110] sm:$0xff]
    %v152 = vld [vmem:[#allocation12 + $0x118] sm:$0xff]
    %v153 = vld [vmem:[#allocation12 + $0x120] sm:$0xff]
    %v154 = vld [vmem:[#allocation12 + $0x128] sm:$0xff]
    %v155 = vld [vmem:[#allocation12 + $0x130] sm:$0xff]
    %v156 = vld [vmem:[#allocation12 + $0x138] sm:$0xff]
    %v157 = vld [vmem:[#allocation12 + $0x140] sm:$0xff]
    %v158 = vld [vmem:[#allocation12 + $0x148] sm:$0xff]
    %v159 = vld [vmem:[#allocation12 + $0x150] sm:$0xff]
    %v160 = vld [vmem:[#allocation12 + $0x158] sm:$0xff]
    %v161 = vld [vmem:[#allocation12 + $0x160] sm:$0xff]
    %v162 = vld [vmem:[#allocation12 + $0x168] sm:$0xff]
    %v163 = vld [vmem:[#allocation12 + $0x170] sm:$0xff]
    %v164 = vld [vmem:[#allocation12 + $0x178] sm:$0xff]
    %165 = vmatprep.subr.mxu0 %v118
    %166 = vmatpush1.msra.mxu0 %v117
    %167 = vmatprep.subr.mxu0 %v121
    %168 = vmatpush1.msra.mxu0 %v120
    %169 = vmatprep.subr.mxu0 %v124
    %170 = vmatpush1.msra.mxu0 %v123
    %171 = vmatprep.subr.mxu0 %v127
    %172 = vmatpush1.msra.mxu0 %v126
    %173 = vmatprep.subr.mxu0 %v130
    %174 = vmatpush1.msra.mxu0 %v129
    %175 = vmatprep.subr.mxu0 %v133
    %176 = vmatpush1.msra.mxu0 %v132
    %177 = vmatprep.subr.mxu0 %v136
    %178 = vmatpush1.msra.mxu0 %v135
    %179 = vmatprep.subr.mxu0 %v139
    %180 = vmatpush1.msra.mxu0 %v138
    %181 = vmatprep.subr.mxu0 %v142
    %182 = vmatpush1.msra.mxu0 %v141
    %183 = vmatprep.subr.mxu0 %v145
    %184 = vmatpush1.msra.mxu0 %v144
    %185 = vmatprep.subr.mxu0 %v148
    %186 = vmatpush1.msra.mxu0 %v147
    %187 = vmatprep.subr.mxu0 %v151
    %188 = vmatpush1.msra.mxu0 %v150
    %189 = vmatprep.subr.mxu0 %v154
    %190 = vmatpush1.msra.mxu0 %v153
    %191 = vmatprep.subr.mxu0 %v157
    %192 = vmatpush1.msra.mxu0 %v156
    %193 = vmatprep.subr.mxu0 %v160
    %194 = vmatpush1.msra.mxu0 %v159
    %195 = vmatprep.subr.mxu0 %v163
    %196 = vmatpush1.msra.mxu0 %v162
    %197 = vmatprep.subr.mxu0 0.0
    %198 = vmatpush1.msra.mxu0 0.0
    %199 = vmatprep.subr.mxu0 0.0
    %200 = vmatpush1.msra.mxu0 0.0
    %201 = vmatprep.subr.mxu0 0.0
    %202 = vmatpush1.msra.mxu0 0.0
    %203 = vmatprep.subr.mxu0 0.0
    %204 = vmatpush1.msra.mxu0 0.0
    %205 = vmatprep.subr.mxu0 0.0
    %206 = vmatpush1.msra.mxu0 0.0
    %207 = vmatprep.subr.mxu0 0.0
    %208 = vmatpush1.msra.mxu0 0.0
    %209 = vmatprep.subr.mxu0 0.0
    %210 = vmatpush1.msra.mxu0 0.0
    %211 = vmatprep.subr.mxu0 0.0
    %212 = vmatpush1.msra.mxu0 0.0
    %213 = vmatprep.subr.mxu0 0.0
    %214 = vmatpush1.msra.mxu0 0.0
    %215 = vmatprep.subr.mxu0 0.0
    %216 = vmatpush1.msra.mxu0 0.0
    %217 = vmatprep.subr.mxu0 0.0
    %218 = vmatpush1.msra.mxu0 0.0
    %219 = vmatprep.subr.mxu0 0.0
    %220 = vmatpush1.msra.mxu0 0.0
    %221 = vmatprep.subr.mxu0 0.0
    %222 = vmatpush1.msra.mxu0 0.0
    %223 = vmatprep.subr.mxu0 0.0
    %224 = vmatpush1.msra.mxu0 0.0
    %225 = vmatprep.subr.mxu0 0.0
    %226 = vmatpush1.msra.mxu0 0.0
    %227 = vmatprep.subr.mxu0 0.0
    %228 = vmatpush1.msra.mxu0 0.0
    %229 = vmatprep.mubr.f32.mxu0 0.0
    %230 = vmatmul.mubr.f32.gmra.mrb[0].mxu0 %v116
    %v231 = vpop.f32.mrb[0].mxu0
    %v232 = vadd.f32 0.0, %v231
    %v233 = vpop.f32.mrb[0].mxu0
    %v234 = vadd.f32 0.0, %v233
    %235 = vdwg.mxu0
    %236 = vmatprep.subr.mxu0 0.0
    %237 = vmatpush1.msra.mxu0 %v119
    %238 = vmatprep.subr.mxu0 0.0
    %239 = vmatpush1.msra.mxu0 %v122
    %240 = vmatprep.subr.mxu0 0.0
    %241 = vmatpush1.msra.mxu0 %v125
    %242 = vmatprep.subr.mxu0 0.0
    %243 = vmatpush1.msra.mxu0 %v128
    %244 = vmatprep.subr.mxu0 0.0
    %245 = vmatpush1.msra.mxu0 %v131
    %246 = vmatprep.subr.mxu0 0.0
    %247 = vmatpush1.msra.mxu0 %v134
    %248 = vmatprep.subr.mxu0 0.0
    %249 = vmatpush1.msra.mxu0 %v137
    %250 = vmatprep.subr.mxu0 0.0
    %251 = vmatpush1.msra.mxu0 %v140
    %252 = vmatprep.subr.mxu0 0.0
    %253 = vmatpush1.msra.mxu0 %v143
    %254 = vmatprep.subr.mxu0 0.0
    %255 = vmatpush1.msra.mxu0 %v146
    %256 = vmatprep.subr.mxu0 0.0
    %257 = vmatpush1.msra.mxu0 %v149
    %258 = vmatprep.subr.mxu0 0.0
    %259 = vmatpush1.msra.mxu0 %v152
    %260 = vmatprep.subr.mxu0 0.0
    %261 = vmatpush1.msra.mxu0 %v155
    %262 = vmatprep.subr.mxu0 0.0
    %263 = vmatpush1.msra.mxu0 %v158
    %264 = vmatprep.subr.mxu0 0.0
    %265 = vmatpush1.msra.mxu0 %v161
    %266 = vmatprep.subr.mxu0 0.0
    %267 = vmatpush1.msra.mxu0 %v164
    %268 = vmatprep.subr.mxu0 0.0
    %269 = vmatpush1.msra.mxu0 0.0
    %270 = vmatprep.subr.mxu0 0.0
    %271 = vmatpush1.msra.mxu0 0.0
    %272 = vmatprep.subr.mxu0 0.0
    %273 = vmatpush1.msra.mxu0 0.0
    %274 = vmatprep.subr.mxu0 0.0
    %275 = vmatpush1.msra.mxu0 0.0
    %276 = vmatprep.subr.mxu0 0.0
    %277 = vmatpush1.msra.mxu0 0.0
    %278 = vmatprep.subr.mxu0 0.0
    %279 = vmatpush1.msra.mxu0 0.0
    %280 = vmatprep.subr.mxu0 0.0
    %281 = vmatpush1.msra.mxu0 0.0
    %282 = vmatprep.subr.mxu0 0.0
    %283 = vmatpush1.msra.mxu0 0.0
    %284 = vmatprep.subr.mxu0 0.0
    %285 = vmatpush1.msra.mxu0 0.0
    %286 = vmatprep.subr.mxu0 0.0
    %287 = vmatpush1.msra.mxu0 0.0
    %288 = vmatprep.subr.mxu0 0.0
    %289 = vmatpush1.msra.mxu0 0.0
    %290 = vmatprep.subr.mxu0 0.0
    %291 = vmatpush1.msra.mxu0 0.0
    %292 = vmatprep.subr.mxu0 0.0
    %293 = vmatpush1.msra.mxu0 0.0
    %294 = vmatprep.subr.mxu0 0.0
    %295 = vmatpush1.msra.mxu0 0.0
    %296 = vmatprep.subr.mxu0 0.0
    %297 = vmatpush1.msra.mxu0 0.0
    %298 = vmatprep.subr.mxu0 0.0
    %299 = vmatpush1.msra.mxu0 0.0
    %300 = vmatprep.mubr.f32.mxu0 0.0
    %301 = vmatmul.mubr.f32.gmra.mrb[0].mxu0 %v116
    %v302 = vpop.f32.mrb[0].mxu0
    %v303 = vadd.f32 0.0, %v302
    %v304 = vpop.f32.mrb[0].mxu0
    %305 = vdwg.mxu0
    %306 = vst [vmem:[#allocation3] sm:$0xff] %v232
    %307 = vst [vmem:[#allocation3 + $0x8] sm:$0xff] %v234
    %308 = vst [vmem:[#allocation3 + $0x10] sm:$0xff] %v303
    %v309 = vld [vmem:[%s5] sm:$0x3]
    %v310 = vld [vmem:[%s6] sm:$0x1]
    %v311 = vld [vmem:[%s7] sm:$0x1]
    %v312 = vld [vmem:[#allocation7] sm:$0xff]
    %v313 = vld [vmem:[#allocation3] sm:$0xff]
    %v314 = vld [vmem:[#allocation3 + $0x8] sm:$0xff]
    %v315 = vld [vmem:[#allocation3 + $0x10] sm:$0xff]
    %v316 = vld [vmem:[#allocation13] sm:$0xff]
    %v317 = vld [vmem:[#allocation13 + $0x8] sm:$0xff]
    %v318 = vld [vmem:[#allocation13 + $0x10] sm:$0xff]
    %v319 = vld [vmem:[#allocation13 + $0x18] sm:$0xff]
    %v320 = vld [vmem:[#allocation13 + $0x20] sm:$0xff]
    %v321 = vld [vmem:[#allocation13 + $0x28] sm:$0xff]
    %v322 = vld [vmem:[#allocation13 + $0x30] sm:$0xff]
    %v323 = vld [vmem:[#allocation13 + $0x38] sm:$0xff]
    %v324 = vld [vmem:[#allocation13 + $0x40] sm:$0xff]
    %v325 = vld [vmem:[#allocation13 + $0x48] sm:$0xff]
    %v326 = vld [vmem:[#allocation13 + $0x50] sm:$0xff]
    %v327 = vld [vmem:[#allocation13 + $0x58] sm:$0xff]
    %v328 = vld [vmem:[#allocation13 + $0x60] sm:$0xff]
    %v329 = vld [vmem:[#allocation13 + $0x68] sm:$0xff]
    %v330 = vld [vmem:[#allocation13 + $0x70] sm:$0xff]
    %v331 = vld [vmem:[#allocation13 + $0x78] sm:$0xff]
    %v332 = vld [vmem:[#allocation13 + $0x80] sm:$0xff]
    %v333 = vld [vmem:[#allocation13 + $0x88] sm:$0xff]
    %v334 = vld [vmem:[#allocation13 + $0x90] sm:$0xff]
    %v335 = vld [vmem:[#allocation13 + $0x98] sm:$0xff]
    %v336 = vld [vmem:[#allocation13 + $0xa0] sm:$0xff]
    %v337 = vld [vmem:[#allocation13 + $0xa8] sm:$0xff]
    %v338 = vld [vmem:[#allocation13 + $0xb0] sm:$0xff]
    %v339 = vld [vmem:[#allocation13 + $0xb8] sm:$0xff]
    %v340 = vld [vmem:[#allocation13 + $0xc0] sm:$0xff]
    %v341 = vld [vmem:[#allocation13 + $0xc8] sm:$0xff]
    %v342 = vld [vmem:[#allocation13 + $0xd0] sm:$0xff]
    %v343 = vld [vmem:[#allocation13 + $0xd8] sm:$0xff]
    %v344 = vld [vmem:[#allocation13 + $0xe0] sm:$0xff]
    %v345 = vld [vmem:[#allocation13 + $0xe8] sm:$0xff]
    %v346 = vld [vmem:[#allocation13 + $0xf0] sm:$0xff]
    %v347 = vld [vmem:[#allocation13 + $0xf8] sm:$0xff]
    %v348 = vld [vmem:[#allocation13 + $0x100] sm:$0xff]
    %v349 = vld [vmem:[#allocation13 + $0x108] sm:$0xff]
    %v350 = vld [vmem:[#allocation13 + $0x110] sm:$0xff]
    %v351 = vld [vmem:[#allocation13 + $0x118] sm:$0xff]
    %v352 = vld [vmem:[#allocation13 + $0x120] sm:$0xff]
    %v353 = vld [vmem:[#allocation13 + $0x128] sm:$0xff]
    %v354 = vld [vmem:[#allocation13 + $0x130] sm:$0xff]
    %v355 = vld [vmem:[#allocation13 + $0x138] sm:$0xff]
    %v356 = vld [vmem:[#allocation13 + $0x140] sm:$0xff]
    %v357 = vld [vmem:[#allocation13 + $0x148] sm:$0xff]
    %v358 = vld [vmem:[#allocation13 + $0x150] sm:$0xff]
    %v359 = vld [vmem:[#allocation13 + $0x158] sm:$0xff]
    %v360 = vld [vmem:[#allocation13 + $0x160] sm:$0xff]
    %v361 = vld [vmem:[#allocation13 + $0x168] sm:$0xff]
    %v362 = vld [vmem:[#allocation13 + $0x170] sm:$0xff]
    %v363 = vld [vmem:[#allocation13 + $0x178] sm:$0xff]
    %364 = vmatprep.subr.mxu0 %v317
    %365 = vmatpush1.msra.mxu0 %v316
    %366 = vmatprep.subr.mxu0 %v320
    %367 = vmatpush1.msra.mxu0 %v319
    %368 = vmatprep.subr.mxu0 %v323
    %369 = vmatpush1.msra.mxu0 %v322
    %370 = vmatprep.subr.mxu0 %v326
    %371 = vmatpush1.msra.mxu0 %v325
    %372 = vmatprep.subr.mxu0 %v329
    %373 = vmatpush1.msra.mxu0 %v328
    %374 = vmatprep.subr.mxu0 %v332
    %375 = vmatpush1.msra.mxu0 %v331
    %376 = vmatprep.subr.mxu0 %v335
    %377 = vmatpush1.msra.mxu0 %v334
    %378 = vmatprep.subr.mxu0 %v338
    %379 = vmatpush1.msra.mxu0 %v337
    %380 = vmatprep.subr.mxu0 %v341
    %381 = vmatpush1.msra.mxu0 %v340
    %382 = vmatprep.subr.mxu0 %v344
    %383 = vmatpush1.msra.mxu0 %v343
    %384 = vmatprep.subr.mxu0 %v347
    %385 = vmatpush1.msra.mxu0 %v346
    %386 = vmatprep.subr.mxu0 %v350
    %387 = vmatpush1.msra.mxu0 %v349
    %388 = vmatprep.subr.mxu0 %v353
    %389 = vmatpush1.msra.mxu0 %v352
    %390 = vmatprep.subr.mxu0 %v356
    %391 = vmatpush1.msra.mxu0 %v355
    %392 = vmatprep.subr.mxu0 %v359
    %393 = vmatpush1.msra.mxu0 %v358
    %394 = vmatprep.subr.mxu0 %v362
    %395 = vmatpush1.msra.mxu0 %v361
    %396 = vmatprep.subr.mxu0 0.0
    %397 = vmatpush1.msra.mxu0 0.0
    %398 = vmatprep.subr.mxu0 0.0
    %399 = vmatpush1.msra.mxu0 0.0
    %400 = vmatprep.subr.mxu0 0.0
    %401 = vmatpush1.msra.mxu0 0.0
    %402 = vmatprep.subr.mxu0 0.0
    %403 = vmatpush1.msra.mxu0 0.0
    %404 = vmatprep.subr.mxu0 0.0
    %405 = vmatpush1.msra.mxu0 0.0
    %406 = vmatprep.subr.mxu0 0.0
    %407 = vmatpush1.msra.mxu0 0.0
    %408 = vmatprep.subr.mxu0 0.0
    %409 = vmatpush1.msra.mxu0 0.0
    %410 = vmatprep.subr.mxu0 0.0
    %411 = vmatpush1.msra.mxu0 0.0
    %412 = vmatprep.subr.mxu0 0.0
    %413 = vmatpush1.msra.mxu0 0.0
    %414 = vmatprep.subr.mxu0 0.0
    %415 = vmatpush1.msra.mxu0 0.0
    %416 = vmatprep.subr.mxu0 0.0
    %417 = vmatpush1.msra.mxu0 0.0
    %418 = vmatprep.subr.mxu0 0.0
    %419 = vmatpush1.msra.mxu0 0.0
    %420 = vmatprep.subr.mxu0 0.0
    %421 = vmatpush1.msra.mxu0 0.0
    %422 = vmatprep.subr.mxu0 0.0
    %423 = vmatpush1.msra.mxu0 0.0
    %424 = vmatprep.subr.mxu0 0.0
    %425 = vmatpush1.msra.mxu0 0.0
    %426 = vmatprep.subr.mxu0 0.0
    %427 = vmatpush1.msra.mxu0 0.0
    %428 = vmatprep.mubr.f32.mxu0 0.0
    %429 = vmatmul.mubr.f32.gmra.mrb[0].mxu0 %v312
    %v430 = vpop.f32.mrb[0].mxu0
    %v431 = vadd.f32 0.0, %v430
    %v432 = vpop.f32.mrb[0].mxu0
    %v433 = vadd.f32 0.0, %v432
    %434 = vdwg.mxu0
    %435 = vmatprep.subr.mxu0 0.0
    %436 = vmatpush1.msra.mxu0 %v318
    %437 = vmatprep.subr.mxu0 0.0
    %438 = vmatpush1.msra.mxu0 %v321
    %439 = vmatprep.subr.mxu0 0.0
    %440 = vmatpush1.msra.mxu0 %v324
    %441 = vmatprep.subr.mxu0 0.0
    %442 = vmatpush1.msra.mxu0 %v327
    %443 = vmatprep.subr.mxu0 0.0
    %444 = vmatpush1.msra.mxu0 %v330
    %445 = vmatprep.subr.mxu0 0.0
    %446 = vmatpush1.msra.mxu0 %v333
    %447 = vmatprep.subr.mxu0 0.0
    %448 = vmatpush1.msra.mxu0 %v336
    %449 = vmatprep.subr.mxu0 0.0
    %450 = vmatpush1.msra.mxu0 %v339
    %451 = vmatprep.subr.mxu0 0.0
    %452 = vmatpush1.msra.mxu0 %v342
    %453 = vmatprep.subr.mxu0 0.0
    %454 = vmatpush1.msra.mxu0 %v345
    %455 = vmatprep.subr.mxu0 0.0
    %456 = vmatpush1.msra.mxu0 %v348
    %457 = vmatprep.subr.mxu0 0.0
    %458 = vmatpush1.msra.mxu0 %v351
    %459 = vmatprep.subr.mxu0 0.0
    %460 = vmatpush1.msra.mxu0 %v354
    %461 = vmatprep.subr.mxu0 0.0
    %462 = vmatpush1.msra.mxu0 %v357
    %463 = vmatprep.subr.mxu0 0.0
    %464 = vmatpush1.msra.mxu0 %v360
    %465 = vmatprep.subr.mxu0 0.0
    %466 = vmatpush1.msra.mxu0 %v363
    %467 = vmatprep.subr.mxu0 0.0
    %468 = vmatpush1.msra.mxu0 0.0
    %469 = vmatprep.subr.mxu0 0.0
    %470 = vmatpush1.msra.mxu0 0.0
    %471 = vmatprep.subr.mxu0 0.0
    %472 = vmatpush1.msra.mxu0 0.0
    %473 = vmatprep.subr.mxu0 0.0
    %474 = vmatpush1.msra.mxu0 0.0
    %475 = vmatprep.subr.mxu0 0.0
    %476 = vmatpush1.msra.mxu0 0.0
    %477 = vmatprep.subr.mxu0 0.0
    %478 = vmatpush1.msra.mxu0 0.0
    %479 = vmatprep.subr.mxu0 0.0
    %480 = vmatpush1.msra.mxu0 0.0
    %481 = vmatprep.subr.mxu0 0.0
    %482 = vmatpush1.msra.mxu0 0.0
    %483 = vmatprep.subr.mxu0 0.0
    %484 = vmatpush1.msra.mxu0 0.0
    %485 = vmatprep.subr.mxu0 0.0
    %486 = vmatpush1.msra.mxu0 0.0
    %487 = vmatprep.subr.mxu0 0.0
    %488 = vmatpush1.msra.mxu0 0.0
    %489 = vmatprep.subr.mxu0 0.0
    %490 = vmatpush1.msra.mxu0 0.0
    %491 = vmatprep.subr.mxu0 0.0
    %492 = vmatpush1.msra.mxu0 0.0
    %493 = vmatprep.subr.mxu0 0.0
    %494 = vmatpush1.msra.mxu0 0.0
    %495 = vmatprep.subr.mxu0 0.0
    %496 = vmatpush1.msra.mxu0 0.0
    %497 = vmatprep.subr.mxu0 0.0
    %498 = vmatpush1.msra.mxu0 0.0
    %499 = vmatprep.mubr.f32.mxu0 0.0
    %500 = vmatmul.mubr.f32.gmra.mrb[0].mxu0 %v312
    %v501 = vpop.f32.mrb[0].mxu0
    %v502 = vadd.f32 0.0, %v501
    %v503 = vpop.f32.mrb[0].mxu0
    %504 = vdwg.mxu0
    %v505 = vadd.f32 %v313, %v431
    %v506 = vadd.f32 %v314, %v433
    %v508 = vlaneseq
    %v509 = vshrl.u32 %v508, 7
    %v510 = vsub.s32 0, %v509
    %v511 = vrot.slane %v309, %v510
    %v512 = vlaneseq
    %v513 = vshrl.u32 %v512, 7
    %v514 = vsub.s32 1, %v513
    %v515 = vrot.slane %v309, %v514
    %v518 = vadd.f32 %v505, %v511
    %v519 = vadd.f32 %v506, %v515
    %v520 = vxor.u32 %v518, 2147483648
    %v521 = vxor.u32 %v519, 2147483648
    %v522 = vmul.f32 %v520, 1.442695
    %v523 = vpow.pop %v522
    %v524 = vmul.f32 %v521, 1.442695
    %v525 = vpow.pop %v524
    %v526 = vadd.f32 %v523, 1.0
    %v527 = vadd.f32 %v525, 1.0
    %v528 = vrcp.pop %v526
    %v529 = vmul.f32 1.0, %v528
    %v530 = vrcp.pop %v527
    %v531 = vmul.f32 1.0, %v530
    %v533 = vlaneseq
    %v534 = vshrl.u32 %v533, 7
    %v535 = vsub.s32 0, %v534
    %v536 = vrot.slane %v310, %v535
    %v538 = vadd.f32 %v315, %v536
    %v540 = vlaneseq
    %v541 = vshrl.u32 %v540, 7
    %v542 = vsub.s32 0, %v541
    %v543 = vrot.slane %v311, %v542
    %v545 = vadd.f32 %v502, %v543
    %v546 = vmul.f32 %v529, %v545
    %v547 = vadd.f32 %v538, %v546
    %v548 = vtanh.pop %v547
    %v549 = vsub.f32 1.0, %v531
    %v550 = vmul.f32 %v549, %v548
    %v551 = vmul.f32 %v531, %v312
    %v552 = vadd.f32 %v550, %v551
    %553 = vst [vmem:[#allocation4] sm:$0xff] %v552
    %554 = vst [vmem:[#allocation17] sm:$0xff] %v552
    %v555 = vld [vmem:[#allocation4] sm:$0xff]
    %v556 = vld [vmem:[#allocation15] sm:$0xff]
    %v557 = vld [vmem:[#allocation15 + $0x8] sm:$0xff]
    %v558 = vld [vmem:[#allocation15 + $0x10] sm:$0xff]
    %v559 = vld [vmem:[#allocation15 + $0x18] sm:$0xff]
    %v560 = vld [vmem:[#allocation15 + $0x20] sm:$0xff]
    %v561 = vld [vmem:[#allocation15 + $0x28] sm:$0xff]
    %v562 = vld [vmem:[#allocation15 + $0x30] sm:$0xff]
    %v563 = vld [vmem:[#allocation15 + $0x38] sm:$0xff]
    %v564 = vld [vmem:[#allocation15 + $0x40] sm:$0xff]
    %v565 = vld [vmem:[#allocation15 + $0x48] sm:$0xff]
    %v566 = vld [vmem:[#allocation15 + $0x50] sm:$0xff]
    %v567 = vld [vmem:[#allocation15 + $0x58] sm:$0xff]
    %v568 = vld [vmem:[#allocation15 + $0x60] sm:$0xff]
    %v569 = vld [vmem:[#allocation15 + $0x68] sm:$0xff]
    %v570 = vld [vmem:[#allocation15 + $0x70] sm:$0xff]
    %v571 = vld [vmem:[#allocation15 + $0x78] sm:$0xff]
    %v572 = vld [vmem:[%s9] sm:$0x1]
    %v574 = vlaneseq
    %v575 = vshrl.u32 %v574, 7
    %v576 = vsub.s32 0, %v575
    %v577 = vrot.slane %v572, %v576
    %579 = vmatprep.subr.mxu0 0.0
    %580 = vmatpush1.msra.mxu0 %v556
    %581 = vmatprep.subr.mxu0 0.0
    %582 = vmatpush1.msra.mxu0 %v557
    %583 = vmatprep.subr.mxu0 0.0
    %584 = vmatpush1.msra.mxu0 %v558
    %585 = vmatprep.subr.mxu0 0.0
    %586 = vmatpush1.msra.mxu0 %v559
    %587 = vmatprep.subr.mxu0 0.0
    %588 = vmatpush1.msra.mxu0 %v560
    %589 = vmatprep.subr.mxu0 0.0
    %590 = vmatpush1.msra.mxu0 %v561
    %591 = vmatprep.subr.mxu0 0.0
    %592 = vmatpush1.msra.mxu0 %v562
    %593 = vmatprep.subr.mxu0 0.0
    %594 = vmatpush1.msra.mxu0 %v563
    %595 = vmatprep.subr.mxu0 0.0
    %596 = vmatpush1.msra.mxu0 %v564
    %597 = vmatprep.subr.mxu0 0.0
    %598 = vmatpush1.msra.mxu0 %v565
    %599 = vmatprep.subr.mxu0 0.0
    %600 = vmatpush1.msra.mxu0 %v566
    %601 = vmatprep.subr.mxu0 0.0
    %602 = vmatpush1.msra.mxu0 %v567
    %603 = vmatprep.subr.mxu0 0.0
    %604 = vmatpush1.msra.mxu0 %v568
    %605 = vmatprep.subr.mxu0 0.0
    %606 = vmatpush1.msra.mxu0 %v569
    %607 = vmatprep.subr.mxu0 0.0
    %608 = vmatpush1.msra.mxu0 %v570
    %609 = vmatprep.subr.mxu0 0.0
    %610 = vmatpush1.msra.mxu0 %v571
    %611 = vmatprep.subr.mxu0 0.0
    %612 = vmatpush1.msra.mxu0 0.0
    %613 = vmatprep.subr.mxu0 0.0
    %614 = vmatpush1.msra.mxu0 0.0
    %615 = vmatprep.subr.mxu0 0.0
    %616 = vmatpush1.msra.mxu0 0.0
    %617 = vmatprep.subr.mxu0 0.0
    %618 = vmatpush1.msra.mxu0 0.0
    %619 = vmatprep.subr.mxu0 0.0
    %620 = vmatpush1.msra.mxu0 0.0
    %621 = vmatprep.subr.mxu0 0.0
    %622 = vmatpush1.msra.mxu0 0.0
    %623 = vmatprep.subr.mxu0 0.0
    %624 = vmatpush1.msra.mxu0 0.0
    %625 = vmatprep.subr.mxu0 0.0
    %626 = vmatpush1.msra.mxu0 0.0
    %627 = vmatprep.subr.mxu0 0.0
    %628 = vmatpush1.msra.mxu0 0.0
    %629 = vmatprep.subr.mxu0 0.0
    %630 = vmatpush1.msra.mxu0 0.0
    %631 = vmatprep.subr.mxu0 0.0
    %632 = vmatpush1.msra.mxu0 0.0
    %633 = vmatprep.subr.mxu0 0.0
    %634 = vmatpush1.msra.mxu0 0.0
    %635 = vmatprep.subr.mxu0 0.0
    %636 = vmatpush1.msra.mxu0 0.0
    %637 = vmatprep.subr.mxu0 0.0
    %638 = vmatpush1.msra.mxu0 0.0
    %639 = vmatprep.subr.mxu0 0.0
    %640 = vmatpush1.msra.mxu0 0.0
    %641 = vmatprep.subr.mxu0 0.0
    %642 = vmatpush1.msra.mxu0 0.0
    %643 = vmatprep.mubr.f32.mxu0 0.0
    %644 = vmatmul.mubr.f32.gmra.mrb[0].mxu0 %v555
    %v645 = vpop.f32.mrb[0].mxu0
    %v646 = vadd.f32 %v577, %v645
    %v647 = vpop.f32.mrb[0].mxu0
    %648 = vdwg.mxu0
    %649 = vst [vmem:[#allocation16] sm:$0xff] %v646
    // Predicated region
    $region58: #{tpu_custom_call.1} parent=1 // pred_check
      _
    $region59: #{tpu_custom_call.1} parent=1 // pred_check_branch
      %651 = sbr.rel (0) target = $region61
    $region60: #{tpu_custom_call.1} parent=1 // pred_region
      %s653 = ssub.s32 128, 128
      %654 = vsyncadd [#allocation9], %s653
      %s656 = sshll.u32 [#allocation16], 4
      %s657 = int_to_ptr.vmem [resolvable:$true] %s656
      %659 = dma.vmem_to_hbm [thread:$0]  %s657, 128, %s10, [#allocation9]
    $region61: #{tpu_custom_call.1} parent=1 // pred_fallthru
      _
    // Predicated region
    $region62: #{tpu_custom_call.1} parent=1 // pred_check
      _
    $region63: #{tpu_custom_call.1} parent=1 // pred_check_branch
      %661 = sbr.rel (0) target = $region65
    $region64: #{tpu_custom_call.1} parent=1 // pred_region
      %s663 = ssub.s32 128, 128
      %664 = vsyncadd [#allocation18], %s663
      %s666 = sshll.u32 [#allocation17], 4
      %s667 = int_to_ptr.vmem [resolvable:$true] %s666
      %669 = dma.vmem_to_hbm [thread:$0]  %s667, 128, %s11, [#allocation18]
    $region65: #{tpu_custom_call.1} parent=1 // pred_fallthru
      _
    // Predicated region
    $region66: #{tpu_custom_call.1} parent=1 // pred_check
      _
    $region67: #{tpu_custom_call.1} parent=1 // pred_check_branch
      %671 = sbr.rel (0) target = $region69
    $region68: #{tpu_custom_call.1} parent=1 // pred_region
      %672 = dma.done [#allocation9], 128
    $region69: #{tpu_custom_call.1} parent=1 // pred_fallthru
      _
    // Predicated region
    $region70: #{tpu_custom_call.1} parent=1 // pred_check
      _
    $region71: #{tpu_custom_call.1} parent=1 // pred_check_branch
      %674 = sbr.rel (0) target = $region73
    $region72: #{tpu_custom_call.1} parent=1 // pred_region
      %675 = dma.done [#allocation18], 128
    $region73: #{tpu_custom_call.1} parent=1 // pred_fallthru
      _
    %676 = vsyncpa [#allocation8], 1
    %677 = vsyncpa [#allocation11], 1
    %678 = vsyncpa [#allocation14], 1
    %679 = vsyncpa [#allocation9], 1
    %680 = vsyncpa [#allocation18], 1

</llo_original>
